<compile_context>
chip_gen: v7x
topology: tpu7x:2x2x1
jax: 0.10.0
libtpu: 0.0.40
codegen_flags: <defaults>
</compile_context>

<pallas_src>
import functools

import jax
import jax.numpy as jnp
from jax.experimental import pallas as pl
from jax.experimental.pallas import tpu as pltpu

# ----------------------- config (small synthetic sizes) -----------------------
N_TPRO = 2
N_HIGH = 2
P_TOT = N_TPRO + N_HIGH          # number of learned prompt tokens spliced in
CTX_DIM = 128                    # ctx_dim (ln_final width)
LAYERS = 4                       # text transformer depth -> LAYERS-1 prompt layers
CONTEXT_LEN = 16                 # tokenizer context length
VOCAB = 64
N_CLS = 2
N_DESC = 2                       # descriptions per class ("big_mag" entries)
N_PROMPTS = N_CLS * N_DESC
C_FEAT = 2                       # feats dim 0 (pre-permute)
N_FEAT = 8                       # instances per layer
PAD_ID = 0


# ------------------------------ fused Pallas kernel ----------------------------
# p_ori: out[b, 0]       = emb[b, 0]    + pos[0]
#        out[b, 1:1+P]   = p_input                  (no positional added)
#        out[b, 1+P:]    = emb[b, 1+P:] + pos[1+P:]
#        implemented as: where(prompt_row, 0, emb) + slab,
#        slab = positional rows with rows 1..1+P replaced by p_input.
# p_ins: out[c, l, n]    = x + x @ W^T + b,  x = feats[c, l, n]
#        single f32 MXU matmul over the leading-dim-collapsed (C*Lm1*N, D) slab.
def _make_fused_kernel(p_tot):
    def kernel(emb_ref, slab_ref, feats_ref, wt_ref, b_ref, pori_ref, pins_ref):
        # ---------------- p_ori (one select, one add, one whole-tile store) ----
        S = slab_ref.shape[0]
        row = jax.lax.broadcasted_iota(jnp.int32, (S, 1), 0)        # (S, 1)
        use_pin = jnp.logical_and(row >= 1, row < 1 + p_tot)        # (S, 1) bool
        pori_ref[...] = (jnp.where(use_pin[None], 0.0, emb_ref[...])
                         + slab_ref[...][None, :, :])               # (B, S, D)

        # ---------------- p_ins (zero-copy reshape + one f32 MXU matmul) -------
        feats = feats_ref[...]                                      # (C, L-1, N, D) f32
        C, Lm1, N, D = feats.shape
        x2d = feats.reshape(C * Lm1 * N, D)                         # layout-free collapse
        y = jnp.dot(x2d, wt_ref[...],
                    preferred_element_type=jnp.float32,
                    precision=jax.lax.Precision.HIGHEST)            # (M, D) f32
        pins_ref[...] = (x2d + y + b_ref[...]).reshape(C, Lm1, N, D)

    return kernel


def fused_prompt_kernel(embedding, slab, feats, w_t, bias2d):
    B, S, D = embedding.shape
    C, Lm1, N, _ = feats.shape
    kernel = _make_fused_kernel(P_TOT)
    return pl.pallas_call(
        kernel,
        out_shape=(
            jax.ShapeDtypeStruct((B, S, D), embedding.dtype),       # p_ori
            jax.ShapeDtypeStruct((C, Lm1, N, D), jnp.float32),      # p_ins (feats-major)
        ),
        grid=(1,),
        in_specs=[
            pl.BlockSpec((B, S, D), lambda i: (0, 0, 0)),           # embedding
            pl.BlockSpec((S, D), lambda i: (0, 0)),                 # precombined slab
            pl.BlockSpec((C, Lm1, N, D), lambda i: (0, 0, 0, 0)),   # feats (raw order)
            pl.BlockSpec((D, D), lambda i: (0, 0)),                 # W^T (f32)
            pl.BlockSpec((1, D), lambda i: (0, 0)),                 # bias (f32)
        ],
        out_specs=(
            pl.BlockSpec((B, S, D), lambda i: (0, 0, 0)),
            pl.BlockSpec((C, Lm1, N, D), lambda i: (0, 0, 0, 0)),
        ),
        input_output_aliases={0: 0},   # embedding buffer reused for p_ori (see note)
        compiler_params=pltpu.CompilerParams(
            dimension_semantics=("arbitrary",)),
    )(embedding, slab, feats, w_t, bias2d)


# --------------------------------- glue ---------------------------------------
def build_cls_mask(text, dtype):
    # open_clip TextTransformer.build_cls_mask semantics
    B, S_tok = text.shape
    cls_mask = (text != PAD_ID)[:, None, :]                             # (B, 1, S_tok)
    cls_mask = jnp.pad(cls_mask, ((0, 0), (S_tok, 0), (1, 0)),
                       constant_values=True)                            # (B, S_tok+1, S_tok+1)
    return jnp.where(cls_mask, jnp.asarray(0.0, dtype),
                     jnp.asarray(-jnp.inf, dtype))


def build_causal_mask(num_pos, dtype):
    i = jnp.arange(num_pos)[:, None]
    j = jnp.arange(num_pos)[None, :]
    return jnp.where(j <= i, jnp.asarray(0.0, dtype), jnp.asarray(-jnp.inf, dtype))


def init_params(key):
    ks = jax.random.split(key, 7)
    D = CTX_DIM
    params = {
        # frozen text-tower pieces (synthetic, deterministic)
        "token_embedding": 0.02 * jax.random.normal(ks[0], (VOCAB, D), jnp.float32),
        "positional_embedding": 0.01 * jax.random.normal(ks[1], (CONTEXT_LEN, D), jnp.float32),
        "cls_emb": 0.02 * jax.random.normal(ks[2], (D,), jnp.float32),
        "attn_mask": build_causal_mask(CONTEXT_LEN, jnp.float32),
        # learnable prompt-learner parameters
        "p_uni": 0.02 * jax.random.normal(ks[3], (LAYERS - 1, N_TPRO, D), jnp.float32),
        "p_input": 0.02 * jax.random.normal(ks[4], (P_TOT, D), jnp.float32),
        "p_ins_proj_w": 0.02 * jax.random.normal(ks[5], (D, D), jnp.float32),  # (out, in)
        "p_ins_proj_b": 0.02 * jax.random.normal(ks[6], (D,), jnp.float32),
    }
    return params


@functools.partial(jax.jit, static_argnames=("embed_cls",))
def prompt_learner_forward(feats, tokenized_prompts, params, embed_cls=True):
    # TODO(synk): tokenize()/BPE tokenizer is string processing with no Pallas
    # equivalent; tokenized_prompts are provided as deterministic synthetic ids.
    tok = tokenized_prompts[:, :-1] if embed_cls else tokenized_prompts
    seq_len = tok.shape[1]
    B = tok.shape[0]
    D = CTX_DIM

    # --- frozen embedding path (torch.no_grad block) ---
    embedding = jnp.take(params["token_embedding"], tok, axis=0)        # (B, seq_len, D)
    # cls_emb is not None branch (CoCa/CONCH text tower)
    seq_len += 1
    cls_rep = jnp.broadcast_to(params["cls_emb"][None, None, :], (B, 1, D))
    embedding = jnp.concatenate([embedding, cls_rep], axis=1)           # (B, S, D)
    cls_mask = build_cls_mask(tok, embedding.dtype)
    attn_mask = (params["attn_mask"][None, :seq_len, :seq_len]
                 + cls_mask[:, :seq_len, :seq_len])                     # (B, S, S)

    # --- tiny one-time prep (fused by XLA under jit) ---
    # precombined slab: positional rows, with rows 1..1+P_TOT replaced by p_input
    slab = params["positional_embedding"][:seq_len].astype(embedding.dtype)
    slab = slab.at[1:1 + P_TOT].set(params["p_input"].astype(embedding.dtype))
    w_t = jnp.transpose(params["p_ins_proj_w"]).astype(jnp.float32)     # (in, out) f32
    bias2d = params["p_ins_proj_b"].reshape(1, D).astype(jnp.float32)

    # --- single fused Pallas kernel: p_ori splice + p_ins residual projector ---
    p_ori, p_ins_cn = fused_prompt_kernel(embedding, slab, feats, w_t, bias2d)

    # feats-major -> layer-major: trivial leading-axis transpose, fused by XLA
    C, Lm1, N, _ = feats.shape
    p_ins = jnp.transpose(p_ins_cn, (1, 0, 2, 3)).reshape(Lm1, C * N, D)

    # p_uni: ParameterList returned untouched (stacked here)
    p_uni = params["p_uni"]
    return p_ori, p_ins, p_uni, attn_mask


# ---------------------------- pure-JAX reference -------------------------------
def _reference(feats, tok_full, params, embed_cls=True):
    tok = tok_full[:, :-1] if embed_cls else tok_full
    B = tok.shape[0]
    D = CTX_DIM
    emb = jnp.take(params["token_embedding"], tok, axis=0)
    emb = jnp.concatenate(
        [emb, jnp.broadcast_to(params["cls_emb"][None, None, :], (B, 1, D))], axis=1)
    S = emb.shape[1]
    emb = emb + params["positional_embedding"][:S][None]
    prefix = emb[:, :1]
    suffix = emb[:, 1 + P_TOT:]
    p_input = jnp.broadcast_to(params["p_input"][None], (B, P_TOT, D))
    p_ori = jnp.concatenate([prefix, p_input, suffix], axis=1)

    C, Lm1, N, _ = feats.shape
    x = jnp.transpose(feats, (1, 0, 2, 3)).reshape(Lm1, C * N, D).astype(jnp.float32)
    p_ins = x + (jnp.einsum("lmd,od->lmo", x, params["p_ins_proj_w"],
                            precision=jax.lax.Precision.HIGHEST)
                 + params["p_ins_proj_b"][None, None, :])
    return p_ori, p_ins


# ----------------------------------- main --------------------------------------
if __name__ == "__main__":
    key = jax.random.PRNGKey(0)
    k_param, k_feat, k_tok = jax.random.split(key, 3)

    params = init_params(k_param)

    # feats: (C, L-1, N, D)  -- torch code permutes to (L-1, C, N, D) then flattens
    feats = jax.random.normal(k_feat, (C_FEAT, LAYERS - 1, N_FEAT, CTX_DIM), jnp.float32)

    # synthetic tokenized prompts: SOT=1, body tokens, trailing pads (pad_id=0)
    tok = jax.random.randint(k_tok, (N_PROMPTS, CONTEXT_LEN), 2, VOCAB, dtype=jnp.int32)
    tok = tok.at[:, 0].set(1)
    tok = tok.at[:, -3:].set(PAD_ID)

    p_ori, p_ins, p_uni, attn_mask = prompt_learner_forward(feats, tok, params,
                                                            embed_cls=True)
    jax.block_until_ready((p_ori, p_ins, p_uni, attn_mask))

    # sanity-check against pure-JAX reference (fp32 HIGHEST-precision projector)
    ref_p_ori, ref_p_ins = _reference(feats, tok, params, embed_cls=True)
    assert p_ori.shape == (N_PROMPTS, CONTEXT_LEN, CTX_DIM)
    assert p_ins.shape == (LAYERS - 1, C_FEAT * N_FEAT, CTX_DIM)
    assert attn_mask.shape == (N_PROMPTS, CONTEXT_LEN, CONTEXT_LEN)
    assert jnp.allclose(p_ori, ref_p_ori, atol=1e-5, rtol=1e-5)
    # f32 operands + HIGHEST precision in the kernel -> tight tolerance vs fp32 ref
    assert jnp.allclose(p_ins, ref_p_ins, atol=1e-4, rtol=1e-4)

    print("KERNEL_OK")
</pallas_src>

<mosaic_0001>
module attributes {stable_mosaic.version = 11 : i64} {
  func.func @kernel(%arg0: i32, %arg1: memref<4x16x128xf32, #tpu.memory_space<vmem>>, %arg2: memref<16x128xf32, #tpu.memory_space<vmem>>, %arg3: memref<2x3x8x128xf32, #tpu.memory_space<vmem>>, %arg4: memref<128x128xf32, #tpu.memory_space<vmem>>, %arg5: memref<1x128xf32, #tpu.memory_space<vmem>>, %arg6: memref<4x16x128xf32, #tpu.memory_space<vmem>>, %arg7: memref<2x3x8x128xf32, #tpu.memory_space<vmem>>) attributes {dimension_semantics = [#tpu.dimension_semantics<arbitrary>], iteration_bounds = array<i64: 1>, scalar_prefetch = 0 : i64, scratch_operands = 0 : i64, tpu.core_type = #tpu.core_type<tc>, window_params = [{pipeline_mode = #tpu.pipeline_mode<synchronous>, transform_indices = @transform_0, window_bounds = array<i64: 4, 16, 128>}, {pipeline_mode = #tpu.pipeline_mode<synchronous>, transform_indices = @transform_1, window_bounds = array<i64: 16, 128>}, {pipeline_mode = #tpu.pipeline_mode<synchronous>, transform_indices = @transform_2, window_bounds = array<i64: 2, 3, 8, 128>}, {pipeline_mode = #tpu.pipeline_mode<synchronous>, transform_indices = @transform_3, window_bounds = array<i64: 128, 128>}, {pipeline_mode = #tpu.pipeline_mode<synchronous>, transform_indices = @transform_4, window_bounds = array<i64: 1, 128>}, {pipeline_mode = #tpu.pipeline_mode<synchronous>, transform_indices = @transform_5, window_bounds = array<i64: 4, 16, 128>}, {pipeline_mode = #tpu.pipeline_mode<synchronous>, transform_indices = @transform_6, window_bounds = array<i64: 2, 3, 8, 128>}]} {
    %0 = tpu.iota {dimensions = array<i32: 0>} : vector<16x1xi32>
    %c1_i32 = arith.constant 1 : i32
    %1 = vector.broadcast %c1_i32 : i32 to vector<16x1xi32>
    %2 = arith.cmpi sge, %0, %1 : vector<16x1xi32>
    %c5_i32 = arith.constant 5 : i32
    %3 = vector.broadcast %c5_i32 : i32 to vector<16x1xi32>
    %4 = arith.cmpi slt, %0, %3 : vector<16x1xi32>
    %5 = arith.andi %2, %4 : vector<16x1xi1>
    %6 = vector.shape_cast %5 : vector<16x1xi1> to vector<1x16x1xi1>
    %c0 = arith.constant 0 : index
    %c0_0 = arith.constant 0 : index
    %c0_1 = arith.constant 0 : index
    %7 = vector.load %arg1[%c0, %c0_0, %c0_1] : memref<4x16x128xf32, #tpu.memory_space<vmem>>, vector<4x16x128xf32>
    %cst = arith.constant 0.000000e+00 : f32
    %8 = vector.shape_cast %6 : vector<1x16x1xi1> to vector<1x16x1xi1>
    %9 = vector.broadcast %8 : vector<1x16x1xi1> to vector<4x16x128xi1>
    %10 = vector.broadcast %cst : f32 to vector<4x16x128xf32>
    %11 = arith.select %9, %10, %7 : vector<4x16x128xi1>, vector<4x16x128xf32>
    %c0_2 = arith.constant 0 : index
    %c0_3 = arith.constant 0 : index
    %12 = vector.load %arg2[%c0_2, %c0_3] : memref<16x128xf32, #tpu.memory_space<vmem>>, vector<16x128xf32>
    %13 = vector.shape_cast %12 : vector<16x128xf32> to vector<1x16x128xf32>
    %14 = vector.broadcast %13 : vector<1x16x128xf32> to vector<4x16x128xf32>
    %15 = arith.addf %11, %14 : vector<4x16x128xf32>
    %c0_4 = arith.constant 0 : index
    %c0_5 = arith.constant 0 : index
    %c0_6 = arith.constant 0 : index
    %16 = vector.load %arg6[%c0_4, %c0_5, %c0_6] : memref<4x16x128xf32, #tpu.memory_space<vmem>>, vector<4x16x128xf32>
    tpu.vector_store %arg6[%c0_4, %c0_5, %c0_6], %15 {strides = array<i32>} : memref<4x16x128xf32, #tpu.memory_space<vmem>>, vector<4x16x128xf32>,
    %c0_7 = arith.constant 0 : index
    %c0_8 = arith.constant 0 : index
    %c0_9 = arith.constant 0 : index
    %c0_10 = arith.constant 0 : index
    %17 = vector.load %arg3[%c0_7, %c0_8, %c0_9, %c0_10] : memref<2x3x8x128xf32, #tpu.memory_space<vmem>>, vector<2x3x8x128xf32>
    %18 = vector.shape_cast %17 : vector<2x3x8x128xf32> to vector<48x128xf32>
    %c0_11 = arith.constant 0 : index
    %c0_12 = arith.constant 0 : index
    %19 = vector.load %arg4[%c0_11, %c0_12] : memref<128x128xf32, #tpu.memory_space<vmem>>, vector<128x128xf32>
    %cst_13 = arith.constant dense<0.000000e+00> : vector<48x128xf32>
    %20 = tpu.matmul %18, %19, %cst_13 {dimension_numbers = #tpu.dot_dimension_numbers<[1], [0], [0], [1], [0, 0, 1, 1], [], []>, precision = #tpu.contract_precision<fp32>} : vector<48x128xf32>, vector<128x128xf32>, vector<48x128xf32> -> vector<48x128xf32>
    %21 = arith.addf %18, %20 : vector<48x128xf32>
    %c0_14 = arith.constant 0 : index
    %c0_15 = arith.constant 0 : index
    %22 = vector.load %arg5[%c0_14, %c0_15] : memref<1x128xf32, #tpu.memory_space<vmem>>, vector<1x128xf32>
    %23 = vector.broadcast %22 : vector<1x128xf32> to vector<48x128xf32>
    %24 = arith.addf %21, %23 : vector<48x128xf32>
    %25 = vector.shape_cast %24 : vector<48x128xf32> to vector<2x3x8x128xf32>
    %c0_16 = arith.constant 0 : index
    %c0_17 = arith.constant 0 : index
    %c0_18 = arith.constant 0 : index
    %c0_19 = arith.constant 0 : index
    %26 = vector.load %arg7[%c0_16, %c0_17, %c0_18, %c0_19] : memref<2x3x8x128xf32, #tpu.memory_space<vmem>>, vector<2x3x8x128xf32>
    tpu.vector_store %arg7[%c0_16, %c0_17, %c0_18, %c0_19], %25 {strides = array<i32>} : memref<2x3x8x128xf32, #tpu.memory_space<vmem>>, vector<2x3x8x128xf32>,
    return
  }
  func.func @transform_0(%arg0: i32) -> (i32, i32, i32) {
    %c0_i32 = arith.constant 0 : i32
    %c0_i32_0 = arith.constant 0 : i32
    %c0_i32_1 = arith.constant 0 : i32
    %c0_i32_2 = arith.constant 0 : i32
    return %c0_i32, %c0_i32_0, %c0_i32_1 : i32, i32, i32
  }
  func.func @transform_1(%arg0: i32) -> (i32, i32) {
    %c0_i32 = arith.constant 0 : i32
    %c0_i32_0 = arith.constant 0 : i32
    %c0_i32_1 = arith.constant 0 : i32
    return %c0_i32, %c0_i32_0 : i32, i32
  }
  func.func @transform_2(%arg0: i32) -> (i32, i32, i32, i32) {
    %c0_i32 = arith.constant 0 : i32
    %c0_i32_0 = arith.constant 0 : i32
    %c0_i32_1 = arith.constant 0 : i32
    %c0_i32_2 = arith.constant 0 : i32
    %c0_i32_3 = arith.constant 0 : i32
    return %c0_i32, %c0_i32_0, %c0_i32_1, %c0_i32_2 : i32, i32, i32, i32
  }
  func.func @transform_3(%arg0: i32) -> (i32, i32) {
    %c0_i32 = arith.constant 0 : i32
    %c0_i32_0 = arith.constant 0 : i32
    %c0_i32_1 = arith.constant 0 : i32
    return %c0_i32, %c0_i32_0 : i32, i32
  }
  func.func @transform_4(%arg0: i32) -> (i32, i32) {
    %c0_i32 = arith.constant 0 : i32
    %c0_i32_0 = arith.constant 0 : i32
    %c0_i32_1 = arith.constant 0 : i32
    return %c0_i32, %c0_i32_0 : i32, i32
  }
  func.func @transform_5(%arg0: i32) -> (i32, i32, i32) {
    %c0_i32 = arith.constant 0 : i32
    %c0_i32_0 = arith.constant 0 : i32
    %c0_i32_1 = arith.constant 0 : i32
    %c0_i32_2 = arith.constant 0 : i32
    return %c0_i32, %c0_i32_0, %c0_i32_1 : i32, i32, i32
  }
  func.func @transform_6(%arg0: i32) -> (i32, i32, i32, i32) {
    %c0_i32 = arith.constant 0 : i32
    %c0_i32_0 = arith.constant 0 : i32
    %c0_i32_1 = arith.constant 0 : i32
    %c0_i32_2 = arith.constant 0 : i32
    %c0_i32_3 = arith.constant 0 : i32
    return %c0_i32, %c0_i32_0, %c0_i32_1, %c0_i32_2 : i32, i32, i32, i32
  }
}

</mosaic_0001>

<llo_original>
// kernel: prompt_learner_forward.1
$region0: #{prompt_learner_forward.1}
  #allocation0 [shape = 'u32[]', space=smem, size = 0x4, offset = 0x4, fixed_abs, tag = 'smem constant byte address 0x4 - core index']
  #allocation1 [shape = 'u32[144,128]{1,0:T(1,128)}', space=vmem, size = 0x12000, scoped, tag = 'internal scratch']
  %s0 = inlined_call_operand.vmem [shape: f32[4,16,128], index: 0, kind: input, shape index: {}, may-alias: {0,5}]
  %s1 = inlined_call_operand.vmem [shape: f32[16,128], index: 1, kind: input, shape index: {}]
  %s2 = inlined_call_operand.vmem [shape: f32[2,3,8,128], index: 2, kind: input, shape index: {}]
  %s3 = inlined_call_operand.vmem [shape: f32[128,128], index: 3, kind: input, shape index: {}]
  %s4 = inlined_call_operand.vmem [shape: f32[1,128], index: 4, kind: input, shape index: {}]
  %s5 = inlined_call_operand.vmem [shape: f32[4,16,128], index: 5, kind: output, shape index: {0}, may-alias: {0,5}]
  %s6 = inlined_call_operand.vmem [shape: f32[2,3,8,128], index: 6, kind: output, shape index: {1}]
  %7 = xla_tuple %s5, %s6
  %s8 = sld [smem:[#allocation0]]
  $region38: #{prompt_learner_forward.1} parent=0
    _
  %s10 = ssub.s32 1, %s8
  %s11 = scalar_select 0, %s10, %s8
  // Predicated region
  $region2: #{prompt_learner_forward.1} parent=0 // pred_check
    _
  $region3: #{prompt_learner_forward.1} parent=0 // pred_check_branch
    %13 = sbr.rel (0) target = $region5
  $region4: #{prompt_learner_forward.1} parent=0 // pred_region
    _
  $region5: #{prompt_learner_forward.1} parent=0 // pred_fallthru
    _
  // Predicated region
  $region6: #{prompt_learner_forward.1} parent=0 // pred_check
    _
  $region7: #{prompt_learner_forward.1} parent=0 // pred_check_branch
    %15 = sbr.rel (0) target = $region9
  $region8: #{prompt_learner_forward.1} parent=0 // pred_region
    _
  $region9: #{prompt_learner_forward.1} parent=0 // pred_fallthru
    _
  // Predicated region
  $region10: #{prompt_learner_forward.1} parent=0 // pred_check
    _
  $region11: #{prompt_learner_forward.1} parent=0 // pred_check_branch
    %17 = sbr.rel (0) target = $region13
  $region12: #{prompt_learner_forward.1} parent=0 // pred_region
    _
  $region13: #{prompt_learner_forward.1} parent=0 // pred_fallthru
    _
  // Predicated region
  $region14: #{prompt_learner_forward.1} parent=0 // pred_check
    _
  $region15: #{prompt_learner_forward.1} parent=0 // pred_check_branch
    %19 = sbr.rel (0) target = $region17
  $region16: #{prompt_learner_forward.1} parent=0 // pred_region
    _
  $region17: #{prompt_learner_forward.1} parent=0 // pred_fallthru
    _
  // Predicated region
  $region18: #{prompt_learner_forward.1} parent=0 // pred_check
    _
  $region19: #{prompt_learner_forward.1} parent=0 // pred_check_branch
    %21 = sbr.rel (0) target = $region21
  $region20: #{prompt_learner_forward.1} parent=0 // pred_region
    _
  $region21: #{prompt_learner_forward.1} parent=0 // pred_fallthru
    _
  %v22 = vlaneseq
  %v23 = vshrl.u32 %v22, 7
  %v24 = vadd.s32 %v23, 8
  %vm25 = vcmp.ge.s32.totalorder %v23, 1
  %vm26 = vcmp.ge.s32.totalorder %v24, 1
  %vm27 = vcmp.lt.s32.totalorder %v23, 5
  %vm28 = vcmp.lt.s32.totalorder %v24, 5
  %vm29 = vmand %vm25, %vm27
  %vm30 = vmand %vm26, %vm28
  %v31 = vld [vmem:[%s0] sm:$0xff]
  %v32 = vld [vmem:[%s0 + $0x8] sm:$0xff]
  %v33 = vld [vmem:[%s0 + $0x10] sm:$0xff]
  %v34 = vld [vmem:[%s0 + $0x18] sm:$0xff]
  %v35 = vld [vmem:[%s0 + $0x20] sm:$0xff]
  %v36 = vld [vmem:[%s0 + $0x28] sm:$0xff]
  %v37 = vld [vmem:[%s0 + $0x30] sm:$0xff]
  %v38 = vld [vmem:[%s0 + $0x38] sm:$0xff]
  %v39 = vsel %vm29, 1, 0
  %v40 = vsel %vm30, 1, 0
  %vm41 = vcmp.eq.s32.totalorder %v39, 1
  %vm42 = vcmp.eq.s32.totalorder %v40, 1
  %v43 = vsel %vm41, 0.0, %v31
  %v44 = vsel %vm42, 0.0, %v32
  %v45 = vsel %vm41, 0.0, %v33
  %v46 = vsel %vm42, 0.0, %v34
  %v47 = vsel %vm41, 0.0, %v35
  %v48 = vsel %vm42, 0.0, %v36
  %v49 = vsel %vm41, 0.0, %v37
  %v50 = vsel %vm42, 0.0, %v38
  %v51 = vld [vmem:[%s1] sm:$0xff]
  %v52 = vld [vmem:[%s1 + $0x8] sm:$0xff]
  %v53 = vadd.f32 %v43, %v51
  %v54 = vadd.f32 %v44, %v52
  %v55 = vadd.f32 %v45, %v51
  %v56 = vadd.f32 %v46, %v52
  %v57 = vadd.f32 %v47, %v51
  %v58 = vadd.f32 %v48, %v52
  %v59 = vadd.f32 %v49, %v51
  %v60 = vadd.f32 %v50, %v52
  %61 = vst [vmem:[%s5] sm:$0xff] %v53
  %62 = vst [vmem:[%s5 + $0x8] sm:$0xff] %v54
  %63 = vst [vmem:[%s5 + $0x10] sm:$0xff] %v55
  %64 = vst [vmem:[%s5 + $0x18] sm:$0xff] %v56
  %65 = vst [vmem:[%s5 + $0x20] sm:$0xff] %v57
  %66 = vst [vmem:[%s5 + $0x28] sm:$0xff] %v58
  %67 = vst [vmem:[%s5 + $0x30] sm:$0xff] %v59
  %68 = vst [vmem:[%s5 + $0x38] sm:$0xff] %v60
  %v69 = vld [vmem:[%s2] sm:$0xff]
  %v70 = vld [vmem:[%s2 + $0x8] sm:$0xff]
  %v71 = vld [vmem:[%s2 + $0x10] sm:$0xff]
  %v72 = vld [vmem:[%s2 + $0x18] sm:$0xff]
  %v73 = vld [vmem:[%s2 + $0x20] sm:$0xff]
  %v74 = vld [vmem:[%s2 + $0x28] sm:$0xff]
  %v75 = vld [vmem:[%s3] sm:$0xff]
  %v76 = vld [vmem:[%s3 + $0x8] sm:$0xff]
  %v77 = vld [vmem:[%s3 + $0x10] sm:$0xff]
  %v78 = vld [vmem:[%s3 + $0x18] sm:$0xff]
  %v79 = vld [vmem:[%s3 + $0x20] sm:$0xff]
  %v80 = vld [vmem:[%s3 + $0x28] sm:$0xff]
  %v81 = vld [vmem:[%s3 + $0x30] sm:$0xff]
  %v82 = vld [vmem:[%s3 + $0x38] sm:$0xff]
  %v83 = vld [vmem:[%s3 + $0x40] sm:$0xff]
  %v84 = vld [vmem:[%s3 + $0x48] sm:$0xff]
  %v85 = vld [vmem:[%s3 + $0x50] sm:$0xff]
  %v86 = vld [vmem:[%s3 + $0x58] sm:$0xff]
  %v87 = vld [vmem:[%s3 + $0x60] sm:$0xff]
  %v88 = vld [vmem:[%s3 + $0x68] sm:$0xff]
  %v89 = vld [vmem:[%s3 + $0x70] sm:$0xff]
  %v90 = vld [vmem:[%s3 + $0x78] sm:$0xff]
  %91 = vmatprep.subr.mxu0 0.0
  %v92 = vand.u32 %v75, 4294901760
  %93 = vmatpush1.msra.mxu0 %v92
  %94 = vmatprep.subr.mxu0 0.0
  %v95 = vand.u32 %v76, 4294901760
  %96 = vmatpush1.msra.mxu0 %v95
  %97 = vmatprep.subr.mxu0 0.0
  %v98 = vand.u32 %v77, 4294901760
  %99 = vmatpush1.msra.mxu0 %v98
  %100 = vmatprep.subr.mxu0 0.0
  %v101 = vand.u32 %v78, 4294901760
  %102 = vmatpush1.msra.mxu0 %v101
  %103 = vmatprep.subr.mxu0 0.0
  %v104 = vand.u32 %v79, 4294901760
  %105 = vmatpush1.msra.mxu0 %v104
  %106 = vmatprep.subr.mxu0 0.0
  %v107 = vand.u32 %v80, 4294901760
  %108 = vmatpush1.msra.mxu0 %v107
  %109 = vmatprep.subr.mxu0 0.0
  %v110 = vand.u32 %v81, 4294901760
  %111 = vmatpush1.msra.mxu0 %v110
  %112 = vmatprep.subr.mxu0 0.0
  %v113 = vand.u32 %v82, 4294901760
  %114 = vmatpush1.msra.mxu0 %v113
  %115 = vmatprep.subr.mxu0 0.0
  %v116 = vand.u32 %v83, 4294901760
  %117 = vmatpush1.msra.mxu0 %v116
  %118 = vmatprep.subr.mxu0 0.0
  %v119 = vand.u32 %v84, 4294901760
  %120 = vmatpush1.msra.mxu0 %v119
  %121 = vmatprep.subr.mxu0 0.0
  %v122 = vand.u32 %v85, 4294901760
  %123 = vmatpush1.msra.mxu0 %v122
  %124 = vmatprep.subr.mxu0 0.0
  %v125 = vand.u32 %v86, 4294901760
  %126 = vmatpush1.msra.mxu0 %v125
  %127 = vmatprep.subr.mxu0 0.0
  %v128 = vand.u32 %v87, 4294901760
  %129 = vmatpush1.msra.mxu0 %v128
  %130 = vmatprep.subr.mxu0 0.0
  %v131 = vand.u32 %v88, 4294901760
  %132 = vmatpush1.msra.mxu0 %v131
  %133 = vmatprep.subr.mxu0 0.0
  %v134 = vand.u32 %v89, 4294901760
  %135 = vmatpush1.msra.mxu0 %v134
  %136 = vmatprep.subr.mxu0 0.0
  %v137 = vand.u32 %v90, 4294901760
  %138 = vmatpush1.msra.mxu0 %v137
  %139 = vmatprep.subr.mxu0 0.0
  %140 = vmatpush1.msra.mxu0 0.0
  %141 = vmatprep.subr.mxu0 0.0
  %142 = vmatpush1.msra.mxu0 0.0
  %143 = vmatprep.subr.mxu0 0.0
  %144 = vmatpush1.msra.mxu0 0.0
  %145 = vmatprep.subr.mxu0 0.0
  %146 = vmatpush1.msra.mxu0 0.0
  %147 = vmatprep.subr.mxu0 0.0
  %148 = vmatpush1.msra.mxu0 0.0
  %149 = vmatprep.subr.mxu0 0.0
  %150 = vmatpush1.msra.mxu0 0.0
  %151 = vmatprep.subr.mxu0 0.0
  %152 = vmatpush1.msra.mxu0 0.0
  %153 = vmatprep.subr.mxu0 0.0
  %154 = vmatpush1.msra.mxu0 0.0
  %155 = vmatprep.subr.mxu0 0.0
  %156 = vmatpush1.msra.mxu0 0.0
  %157 = vmatprep.subr.mxu0 0.0
  %158 = vmatpush1.msra.mxu0 0.0
  %159 = vmatprep.subr.mxu0 0.0
  %160 = vmatpush1.msra.mxu0 0.0
  %161 = vmatprep.subr.mxu0 0.0
  %162 = vmatpush1.msra.mxu0 0.0
  %163 = vmatprep.subr.mxu0 0.0
  %164 = vmatpush1.msra.mxu0 0.0
  %165 = vmatprep.subr.mxu0 0.0
  %166 = vmatpush1.msra.mxu0 0.0
  %167 = vmatprep.subr.mxu0 0.0
  %168 = vmatpush1.msra.mxu0 0.0
  %169 = vmatprep.subr.mxu0 0.0
  %170 = vmatpush1.msra.mxu0 0.0
  %171 = vmatprep.mubr.f32.mxu0 0.0
  %v172 = vand.u32 %v69, 4294901760
  %v173 = vsub.f32 %v69, %v172
  %v174 = vand.u32 %v173, 4294901760
  %v175 = vsub.f32 %v173, %v174
  %v176 = vand.u32 %v175, 4294901760
  %177 = vmatmul.mubr.f32.gmra.mrb[0].mxu0 %v176
  %v178 = vpop.f32.mrb[0].mxu0
  %v179 = vadd.f32 0.0, %v178
  %v180 = vpop.f32.mrb[0].mxu0
  %181 = vmatprep.mubr.f32.mxu0 0.0
  %v182 = vand.u32 %v70, 4294901760
  %v183 = vsub.f32 %v70, %v182
  %v184 = vand.u32 %v183, 4294901760
  %v185 = vsub.f32 %v183, %v184
  %v186 = vand.u32 %v185, 4294901760
  %187 = vmatmul.mubr.f32.gmra.mrb[0].mxu0 %v186
  %v188 = vpop.f32.mrb[0].mxu0
  %v189 = vadd.f32 0.0, %v188
  %v190 = vpop.f32.mrb[0].mxu0
  %191 = vmatprep.mubr.f32.mxu0 0.0
  %v192 = vand.u32 %v71, 4294901760
  %v193 = vsub.f32 %v71, %v192
  %v194 = vand.u32 %v193, 4294901760
  %v195 = vsub.f32 %v193, %v194
  %v196 = vand.u32 %v195, 4294901760
  %197 = vmatmul.mubr.f32.gmra.mrb[0].mxu0 %v196
  %v198 = vpop.f32.mrb[0].mxu0
  %v199 = vadd.f32 0.0, %v198
  %v200 = vpop.f32.mrb[0].mxu0
  %201 = vmatprep.mubr.f32.mxu0 0.0
  %v202 = vand.u32 %v72, 4294901760
  %v203 = vsub.f32 %v72, %v202
  %v204 = vand.u32 %v203, 4294901760
  %v205 = vsub.f32 %v203, %v204
  %v206 = vand.u32 %v205, 4294901760
  %207 = vmatmul.mubr.f32.gmra.mrb[0].mxu0 %v206
  %v208 = vpop.f32.mrb[0].mxu0
  %v209 = vadd.f32 0.0, %v208
  %v210 = vpop.f32.mrb[0].mxu0
  %211 = vmatprep.mubr.f32.mxu0 0.0
  %v212 = vand.u32 %v73, 4294901760
  %v213 = vsub.f32 %v73, %v212
  %v214 = vand.u32 %v213, 4294901760
  %v215 = vsub.f32 %v213, %v214
  %v216 = vand.u32 %v215, 4294901760
  %217 = vmatmul.mubr.f32.gmra.mrb[0].mxu0 %v216
  %v218 = vpop.f32.mrb[0].mxu0
  %v219 = vadd.f32 0.0, %v218
  %v220 = vpop.f32.mrb[0].mxu0
  %221 = vmatprep.mubr.f32.mxu0 0.0
  %v222 = vand.u32 %v74, 4294901760
  %v223 = vsub.f32 %v74, %v222
  %v224 = vand.u32 %v223, 4294901760
  %v225 = vsub.f32 %v223, %v224
  %v226 = vand.u32 %v225, 4294901760
  %227 = vmatmul.mubr.f32.gmra.mrb[0].mxu0 %v226
  %v228 = vpop.f32.mrb[0].mxu0
  %v229 = vadd.f32 0.0, %v228
  %v230 = vpop.f32.mrb[0].mxu0
  %231 = vdwg.mxu0
  %232 = vmatprep.subr.mxu0 0.0
  %v233 = vand.u32 %v75, 4294901760
  %v234 = vsub.f32 %v75, %v233
  %v235 = vand.u32 %v234, 4294901760
  %v236 = vsub.f32 %v234, %v235
  %v237 = vand.u32 %v236, 4294901760
  %238 = vmatpush1.msra.mxu0 %v237
  %239 = vmatprep.subr.mxu0 0.0
  %v240 = vand.u32 %v76, 4294901760
  %v241 = vsub.f32 %v76, %v240
  %v242 = vand.u32 %v241, 4294901760
  %v243 = vsub.f32 %v241, %v242
  %v244 = vand.u32 %v243, 4294901760
  %245 = vmatpush1.msra.mxu0 %v244
  %246 = vmatprep.subr.mxu0 0.0
  %v247 = vand.u32 %v77, 4294901760
  %v248 = vsub.f32 %v77, %v247
  %v249 = vand.u32 %v248, 4294901760
  %v250 = vsub.f32 %v248, %v249
  %v251 = vand.u32 %v250, 4294901760
  %252 = vmatpush1.msra.mxu0 %v251
  %253 = vmatprep.subr.mxu0 0.0
  %v254 = vand.u32 %v78, 4294901760
  %v255 = vsub.f32 %v78, %v254
  %v256 = vand.u32 %v255, 4294901760
  %v257 = vsub.f32 %v255, %v256
  %v258 = vand.u32 %v257, 4294901760
  %259 = vmatpush1.msra.mxu0 %v258
  %260 = vmatprep.subr.mxu0 0.0
  %v261 = vand.u32 %v79, 4294901760
  %v262 = vsub.f32 %v79, %v261
  %v263 = vand.u32 %v262, 4294901760
  %v264 = vsub.f32 %v262, %v263
  %v265 = vand.u32 %v264, 4294901760
  %266 = vmatpush1.msra.mxu0 %v265
  %267 = vmatprep.subr.mxu0 0.0
  %v268 = vand.u32 %v80, 4294901760
  %v269 = vsub.f32 %v80, %v268
  %v270 = vand.u32 %v269, 4294901760
  %v271 = vsub.f32 %v269, %v270
  %v272 = vand.u32 %v271, 4294901760
  %273 = vmatpush1.msra.mxu0 %v272
  %274 = vmatprep.subr.mxu0 0.0
  %v275 = vand.u32 %v81, 4294901760
  %v276 = vsub.f32 %v81, %v275
  %v277 = vand.u32 %v276, 4294901760
  %v278 = vsub.f32 %v276, %v277
  %v279 = vand.u32 %v278, 4294901760
  %280 = vmatpush1.msra.mxu0 %v279
  %281 = vmatprep.subr.mxu0 0.0
  %v282 = vand.u32 %v82, 4294901760
  %v283 = vsub.f32 %v82, %v282
  %v284 = vand.u32 %v283, 4294901760
  %v285 = vsub.f32 %v283, %v284
  %v286 = vand.u32 %v285, 4294901760
  %287 = vmatpush1.msra.mxu0 %v286
  %288 = vmatprep.subr.mxu0 0.0
  %v289 = vand.u32 %v83, 4294901760
  %v290 = vsub.f32 %v83, %v289
  %v291 = vand.u32 %v290, 4294901760
  %v292 = vsub.f32 %v290, %v291
  %v293 = vand.u32 %v292, 4294901760
  %294 = vmatpush1.msra.mxu0 %v293
  %295 = vmatprep.subr.mxu0 0.0
  %v296 = vand.u32 %v84, 4294901760
  %v297 = vsub.f32 %v84, %v296
  %v298 = vand.u32 %v297, 4294901760
  %v299 = vsub.f32 %v297, %v298
  %v300 = vand.u32 %v299, 4294901760
  %301 = vmatpush1.msra.mxu0 %v300
  %302 = vmatprep.subr.mxu0 0.0
  %v303 = vand.u32 %v85, 4294901760
  %v304 = vsub.f32 %v85, %v303
  %v305 = vand.u32 %v304, 4294901760
  %v306 = vsub.f32 %v304, %v305
  %v307 = vand.u32 %v306, 4294901760
  %308 = vmatpush1.msra.mxu0 %v307
  %309 = vmatprep.subr.mxu0 0.0
  %v310 = vand.u32 %v86, 4294901760
  %v311 = vsub.f32 %v86, %v310
  %v312 = vand.u32 %v311, 4294901760
  %v313 = vsub.f32 %v311, %v312
  %v314 = vand.u32 %v313, 4294901760
  %315 = vmatpush1.msra.mxu0 %v314
  %316 = vmatprep.subr.mxu0 0.0
  %v317 = vand.u32 %v87, 4294901760
  %v318 = vsub.f32 %v87, %v317
  %v319 = vand.u32 %v318, 4294901760
  %v320 = vsub.f32 %v318, %v319
  %v321 = vand.u32 %v320, 4294901760
  %322 = vmatpush1.msra.mxu0 %v321
  %323 = vmatprep.subr.mxu0 0.0
  %v324 = vand.u32 %v88, 4294901760
  %v325 = vsub.f32 %v88, %v324
  %v326 = vand.u32 %v325, 4294901760
  %v327 = vsub.f32 %v325, %v326
  %v328 = vand.u32 %v327, 4294901760
  %329 = vmatpush1.msra.mxu0 %v328
  %330 = vmatprep.subr.mxu0 0.0
  %v331 = vand.u32 %v89, 4294901760
  %v332 = vsub.f32 %v89, %v331
  %v333 = vand.u32 %v332, 4294901760
  %v334 = vsub.f32 %v332, %v333
  %v335 = vand.u32 %v334, 4294901760
  %336 = vmatpush1.msra.mxu0 %v335
  %337 = vmatprep.subr.mxu0 0.0
  %v338 = vand.u32 %v90, 4294901760
  %v339 = vsub.f32 %v90, %v338
  %v340 = vand.u32 %v339, 4294901760
  %v341 = vsub.f32 %v339, %v340
  %v342 = vand.u32 %v341, 4294901760
  %343 = vmatpush1.msra.mxu0 %v342
  %344 = vmatprep.subr.mxu0 0.0
  %345 = vmatpush1.msra.mxu0 0.0
  %346 = vmatprep.subr.mxu0 0.0
  %347 = vmatpush1.msra.mxu0 0.0
  %348 = vmatprep.subr.mxu0 0.0
  %349 = vmatpush1.msra.mxu0 0.0
  %350 = vmatprep.subr.mxu0 0.0
  %351 = vmatpush1.msra.mxu0 0.0
  %352 = vmatprep.subr.mxu0 0.0
  %353 = vmatpush1.msra.mxu0 0.0
  %354 = vmatprep.subr.mxu0 0.0
  %355 = vmatpush1.msra.mxu0 0.0
  %356 = vmatprep.subr.mxu0 0.0
  %357 = vmatpush1.msra.mxu0 0.0
  %358 = vmatprep.subr.mxu0 0.0
  %359 = vmatpush1.msra.mxu0 0.0
  %360 = vmatprep.subr.mxu0 0.0
  %361 = vmatpush1.msra.mxu0 0.0
  %362 = vmatprep.subr.mxu0 0.0
  %363 = vmatpush1.msra.mxu0 0.0
  %364 = vmatprep.subr.mxu0 0.0
  %365 = vmatpush1.msra.mxu0 0.0
  %366 = vmatprep.subr.mxu0 0.0
  %367 = vmatpush1.msra.mxu0 0.0
  %368 = vmatprep.subr.mxu0 0.0
  %369 = vmatpush1.msra.mxu0 0.0
  %370 = vmatprep.subr.mxu0 0.0
  %371 = vmatpush1.msra.mxu0 0.0
  %372 = vmatprep.subr.mxu0 0.0
  %373 = vmatpush1.msra.mxu0 0.0
  %374 = vmatprep.subr.mxu0 0.0
  %375 = vmatpush1.msra.mxu0 0.0
  %376 = vmatprep.mubr.f32.mxu0 0.0
  %v377 = vand.u32 %v69, 4294901760
  %378 = vmatmul.mubr.f32.gmra.mrb[0].mxu0 %v377
  %v379 = vpop.f32.mrb[0].mxu0
  %v380 = vadd.f32 %v179, %v379
  %v381 = vpop.f32.mrb[0].mxu0
  %382 = vmatprep.mubr.f32.mxu0 0.0
  %v383 = vand.u32 %v70, 4294901760
  %384 = vmatmul.mubr.f32.gmra.mrb[0].mxu0 %v383
  %v385 = vpop.f32.mrb[0].mxu0
  %v386 = vadd.f32 %v189, %v385
  %v387 = vpop.f32.mrb[0].mxu0
  %388 = vmatprep.mubr.f32.mxu0 0.0
  %v389 = vand.u32 %v71, 4294901760
  %390 = vmatmul.mubr.f32.gmra.mrb[0].mxu0 %v389
  %v391 = vpop.f32.mrb[0].mxu0
  %v392 = vadd.f32 %v199, %v391
  %v393 = vpop.f32.mrb[0].mxu0
  %394 = vmatprep.mubr.f32.mxu0 0.0
  %v395 = vand.u32 %v72, 4294901760
  %396 = vmatmul.mubr.f32.gmra.mrb[0].mxu0 %v395
  %v397 = vpop.f32.mrb[0].mxu0
  %v398 = vadd.f32 %v209, %v397
  %v399 = vpop.f32.mrb[0].mxu0
  %400 = vmatprep.mubr.f32.mxu0 0.0
  %v401 = vand.u32 %v73, 4294901760
  %402 = vmatmul.mubr.f32.gmra.mrb[0].mxu0 %v401
  %v403 = vpop.f32.mrb[0].mxu0
  %v404 = vadd.f32 %v219, %v403
  %v405 = vpop.f32.mrb[0].mxu0
  %406 = vmatprep.mubr.f32.mxu0 0.0
  %v407 = vand.u32 %v74, 4294901760
  %408 = vmatmul.mubr.f32.gmra.mrb[0].mxu0 %v407
  %v409 = vpop.f32.mrb[0].mxu0
  %v410 = vadd.f32 %v229, %v409
  %v411 = vpop.f32.mrb[0].mxu0
  %412 = vdwg.mxu0
  %413 = vmatprep.subr.mxu0 0.0
  %v414 = vand.u32 %v75, 4294901760
  %v415 = vsub.f32 %v75, %v414
  %416 = vmatpush1.msra.mxu0 %v415
  %417 = vmatprep.subr.mxu0 0.0
  %v418 = vand.u32 %v76, 4294901760
  %v419 = vsub.f32 %v76, %v418
  %420 = vmatpush1.msra.mxu0 %v419
  %421 = vmatprep.subr.mxu0 0.0
  %v422 = vand.u32 %v77, 4294901760
  %v423 = vsub.f32 %v77, %v422
  %424 = vmatpush1.msra.mxu0 %v423
  %425 = vmatprep.subr.mxu0 0.0
  %v426 = vand.u32 %v78, 4294901760
  %v427 = vsub.f32 %v78, %v426
  %428 = vmatpush1.msra.mxu0 %v427
  %429 = vmatprep.subr.mxu0 0.0
  %v430 = vand.u32 %v79, 4294901760
  %v431 = vsub.f32 %v79, %v430
  %432 = vmatpush1.msra.mxu0 %v431
  %433 = vmatprep.subr.mxu0 0.0
  %v434 = vand.u32 %v80, 4294901760
  %v435 = vsub.f32 %v80, %v434
  %436 = vmatpush1.msra.mxu0 %v435
  %437 = vmatprep.subr.mxu0 0.0
  %v438 = vand.u32 %v81, 4294901760
  %v439 = vsub.f32 %v81, %v438
  %440 = vmatpush1.msra.mxu0 %v439
  %441 = vmatprep.subr.mxu0 0.0
  %v442 = vand.u32 %v82, 4294901760
  %v443 = vsub.f32 %v82, %v442
  %444 = vmatpush1.msra.mxu0 %v443
  %445 = vmatprep.subr.mxu0 0.0
  %v446 = vand.u32 %v83, 4294901760
  %v447 = vsub.f32 %v83, %v446
  %448 = vmatpush1.msra.mxu0 %v447
  %449 = vmatprep.subr.mxu0 0.0
  %v450 = vand.u32 %v84, 4294901760
  %v451 = vsub.f32 %v84, %v450
  %452 = vmatpush1.msra.mxu0 %v451
  %453 = vmatprep.subr.mxu0 0.0
  %v454 = vand.u32 %v85, 4294901760
  %v455 = vsub.f32 %v85, %v454
  %456 = vmatpush1.msra.mxu0 %v455
  %457 = vmatprep.subr.mxu0 0.0
  %v458 = vand.u32 %v86, 4294901760
  %v459 = vsub.f32 %v86, %v458
  %460 = vmatpush1.msra.mxu0 %v459
  %461 = vmatprep.subr.mxu0 0.0
  %v462 = vand.u32 %v87, 4294901760
  %v463 = vsub.f32 %v87, %v462
  %464 = vmatpush1.msra.mxu0 %v463
  %465 = vmatprep.subr.mxu0 0.0
  %v466 = vand.u32 %v88, 4294901760
  %v467 = vsub.f32 %v88, %v466
  %468 = vmatpush1.msra.mxu0 %v467
  %469 = vmatprep.subr.mxu0 0.0
  %v470 = vand.u32 %v89, 4294901760
  %v471 = vsub.f32 %v89, %v470
  %472 = vmatpush1.msra.mxu0 %v471
  %473 = vmatprep.subr.mxu0 0.0
  %v474 = vand.u32 %v90, 4294901760
  %v475 = vsub.f32 %v90, %v474
  %476 = vmatpush1.msra.mxu0 %v475
  %477 = vmatprep.subr.mxu0 0.0
  %478 = vmatpush1.msra.mxu0 0.0
  %479 = vmatprep.subr.mxu0 0.0
  %480 = vmatpush1.msra.mxu0 0.0
  %481 = vmatprep.subr.mxu0 0.0
  %482 = vmatpush1.msra.mxu0 0.0
  %483 = vmatprep.subr.mxu0 0.0
  %484 = vmatpush1.msra.mxu0 0.0
  %485 = vmatprep.subr.mxu0 0.0
  %486 = vmatpush1.msra.mxu0 0.0
  %487 = vmatprep.subr.mxu0 0.0
  %488 = vmatpush1.msra.mxu0 0.0
  %489 = vmatprep.subr.mxu0 0.0
  %490 = vmatpush1.msra.mxu0 0.0
  %491 = vmatprep.subr.mxu0 0.0
  %492 = vmatpush1.msra.mxu0 0.0
  %493 = vmatprep.subr.mxu0 0.0
  %494 = vmatpush1.msra.mxu0 0.0
  %495 = vmatprep.subr.mxu0 0.0
  %496 = vmatpush1.msra.mxu0 0.0
  %497 = vmatprep.subr.mxu0 0.0
  %498 = vmatpush1.msra.mxu0 0.0
  %499 = vmatprep.subr.mxu0 0.0
  %500 = vmatpush1.msra.mxu0 0.0
  %501 = vmatprep.subr.mxu0 0.0
  %502 = vmatpush1.msra.mxu0 0.0
  %503 = vmatprep.subr.mxu0 0.0
  %504 = vmatpush1.msra.mxu0 0.0
  %505 = vmatprep.subr.mxu0 0.0
  %506 = vmatpush1.msra.mxu0 0.0
  %507 = vmatprep.subr.mxu0 0.0
  %508 = vmatpush1.msra.mxu0 0.0
  %509 = vmatprep.mubr.f32.mxu0 0.0
  %v510 = vand.u32 %v69, 4294901760
  %v511 = vsub.f32 %v69, %v510
  %512 = vmatmul.mubr.f32.gmra.mrb[0].mxu0 %v511
  %v513 = vpop.f32.mrb[0].mxu0
  %v514 = vadd.f32 %v380, %v513
  %v515 = vpop.f32.mrb[0].mxu0
  %516 = vmatprep.mubr.f32.mxu0 0.0
  %v517 = vand.u32 %v70, 4294901760
  %v518 = vsub.f32 %v70, %v517
  %519 = vmatmul.mubr.f32.gmra.mrb[0].mxu0 %v518
  %v520 = vpop.f32.mrb[0].mxu0
  %v521 = vadd.f32 %v386, %v520
  %v522 = vpop.f32.mrb[0].mxu0
  %523 = vmatprep.mubr.f32.mxu0 0.0
  %v524 = vand.u32 %v71, 4294901760
  %v525 = vsub.f32 %v71, %v524
  %526 = vmatmul.mubr.f32.gmra.mrb[0].mxu0 %v525
  %v527 = vpop.f32.mrb[0].mxu0
  %v528 = vadd.f32 %v392, %v527
  %v529 = vpop.f32.mrb[0].mxu0
  %530 = vmatprep.mubr.f32.mxu0 0.0
  %v531 = vand.u32 %v72, 4294901760
  %v532 = vsub.f32 %v72, %v531
  %533 = vmatmul.mubr.f32.gmra.mrb[0].mxu0 %v532
  %v534 = vpop.f32.mrb[0].mxu0
  %v535 = vadd.f32 %v398, %v534
  %v536 = vpop.f32.mrb[0].mxu0
  %537 = vmatprep.mubr.f32.mxu0 0.0
  %v538 = vand.u32 %v73, 4294901760
  %v539 = vsub.f32 %v73, %v538
  %540 = vmatmul.mubr.f32.gmra.mrb[0].mxu0 %v539
  %v541 = vpop.f32.mrb[0].mxu0
  %v542 = vadd.f32 %v404, %v541
  %v543 = vpop.f32.mrb[0].mxu0
  %544 = vmatprep.mubr.f32.mxu0 0.0
  %v545 = vand.u32 %v74, 4294901760
  %v546 = vsub.f32 %v74, %v545
  %547 = vmatmul.mubr.f32.gmra.mrb[0].mxu0 %v546
  %v548 = vpop.f32.mrb[0].mxu0
  %v549 = vadd.f32 %v410, %v548
  %v550 = vpop.f32.mrb[0].mxu0
  %551 = vdwg.mxu0
  %552 = vmatprep.subr.mxu0 0.0
  %v553 = vand.u32 %v75, 4294901760
  %554 = vmatpush1.msra.mxu0 %v553
  %555 = vmatprep.subr.mxu0 0.0
  %v556 = vand.u32 %v76, 4294901760
  %557 = vmatpush1.msra.mxu0 %v556
  %558 = vmatprep.subr.mxu0 0.0
  %v559 = vand.u32 %v77, 4294901760
  %560 = vmatpush1.msra.mxu0 %v559
  %561 = vmatprep.subr.mxu0 0.0
  %v562 = vand.u32 %v78, 4294901760
  %563 = vmatpush1.msra.mxu0 %v562
  %564 = vmatprep.subr.mxu0 0.0
  %v565 = vand.u32 %v79, 4294901760
  %566 = vmatpush1.msra.mxu0 %v565
  %567 = vmatprep.subr.mxu0 0.0
  %v568 = vand.u32 %v80, 4294901760
  %569 = vmatpush1.msra.mxu0 %v568
  %570 = vmatprep.subr.mxu0 0.0
  %v571 = vand.u32 %v81, 4294901760
  %572 = vmatpush1.msra.mxu0 %v571
  %573 = vmatprep.subr.mxu0 0.0
  %v574 = vand.u32 %v82, 4294901760
  %575 = vmatpush1.msra.mxu0 %v574
  %576 = vmatprep.subr.mxu0 0.0
  %v577 = vand.u32 %v83, 4294901760
  %578 = vmatpush1.msra.mxu0 %v577
  %579 = vmatprep.subr.mxu0 0.0
  %v580 = vand.u32 %v84, 4294901760
  %581 = vmatpush1.msra.mxu0 %v580
  %582 = vmatprep.subr.mxu0 0.0
  %v583 = vand.u32 %v85, 4294901760
  %584 = vmatpush1.msra.mxu0 %v583
  %585 = vmatprep.subr.mxu0 0.0
  %v586 = vand.u32 %v86, 4294901760
  %587 = vmatpush1.msra.mxu0 %v586
  %588 = vmatprep.subr.mxu0 0.0
  %v589 = vand.u32 %v87, 4294901760
  %590 = vmatpush1.msra.mxu0 %v589
  %591 = vmatprep.subr.mxu0 0.0
  %v592 = vand.u32 %v88, 4294901760
  %593 = vmatpush1.msra.mxu0 %v592
  %594 = vmatprep.subr.mxu0 0.0
  %v595 = vand.u32 %v89, 4294901760
  %596 = vmatpush1.msra.mxu0 %v595
  %597 = vmatprep.subr.mxu0 0.0
  %v598 = vand.u32 %v90, 4294901760
  %599 = vmatpush1.msra.mxu0 %v598
  %600 = vmatprep.subr.mxu0 0.0
  %601 = vmatpush1.msra.mxu0 0.0
  %602 = vmatprep.subr.mxu0 0.0
  %603 = vmatpush1.msra.mxu0 0.0
  %604 = vmatprep.subr.mxu0 0.0
  %605 = vmatpush1.msra.mxu0 0.0
  %606 = vmatprep.subr.mxu0 0.0
  %607 = vmatpush1.msra.mxu0 0.0
  %608 = vmatprep.subr.mxu0 0.0
  %609 = vmatpush1.msra.mxu0 0.0
  %610 = vmatprep.subr.mxu0 0.0
  %611 = vmatpush1.msra.mxu0 0.0
  %612 = vmatprep.subr.mxu0 0.0
  %613 = vmatpush1.msra.mxu0 0.0
  %614 = vmatprep.subr.mxu0 0.0
  %615 = vmatpush1.msra.mxu0 0.0
  %616 = vmatprep.subr.mxu0 0.0
  %617 = vmatpush1.msra.mxu0 0.0
  %618 = vmatprep.subr.mxu0 0.0
  %619 = vmatpush1.msra.mxu0 0.0
  %620 = vmatprep.subr.mxu0 0.0
  %621 = vmatpush1.msra.mxu0 0.0
  %622 = vmatprep.subr.mxu0 0.0
  %623 = vmatpush1.msra.mxu0 0.0
  %624 = vmatprep.subr.mxu0 0.0
  %625 = vmatpush1.msra.mxu0 0.0
  %626 = vmatprep.subr.mxu0 0.0
  %627 = vmatpush1.msra.mxu0 0.0
  %628 = vmatprep.subr.mxu0 0.0
  %629 = vmatpush1.msra.mxu0 0.0
  %630 = vmatprep.subr.mxu0 0.0
  %631 = vmatpush1.msra.mxu0 0.0
  %632 = vmatprep.mubr.f32.mxu0 0.0
  %v633 = vand.u32 %v69, 4294901760
  %v634 = vsub.f32 %v69, %v633
  %v635 = vand.u32 %v634, 4294901760
  %636 = vmatmul.mubr.f32.gmra.mrb[0].mxu0 %v635
  %v637 = vpop.f32.mrb[0].mxu0
  %v638 = vadd.f32 %v514, %v637
  %v639 = vpop.f32.mrb[0].mxu0
  %640 = vmatprep.mubr.f32.mxu0 0.0
  %v641 = vand.u32 %v70, 4294901760
  %v642 = vsub.f32 %v70, %v641
  %v643 = vand.u32 %v642, 4294901760
  %644 = vmatmul.mubr.f32.gmra.mrb[0].mxu0 %v643
  %v645 = vpop.f32.mrb[0].mxu0
  %v646 = vadd.f32 %v521, %v645
  %v647 = vpop.f32.mrb[0].mxu0
  %648 = vmatprep.mubr.f32.mxu0 0.0
  %v649 = vand.u32 %v71, 4294901760
  %v650 = vsub.f32 %v71, %v649
  %v651 = vand.u32 %v650, 4294901760
  %652 = vmatmul.mubr.f32.gmra.mrb[0].mxu0 %v651
  %v653 = vpop.f32.mrb[0].mxu0
  %v654 = vadd.f32 %v528, %v653
  %v655 = vpop.f32.mrb[0].mxu0
  %656 = vmatprep.mubr.f32.mxu0 0.0
  %v657 = vand.u32 %v72, 4294901760
  %v658 = vsub.f32 %v72, %v657
  %v659 = vand.u32 %v658, 4294901760
  %660 = vmatmul.mubr.f32.gmra.mrb[0].mxu0 %v659
  %v661 = vpop.f32.mrb[0].mxu0
  %v662 = vadd.f32 %v535, %v661
  %v663 = vpop.f32.mrb[0].mxu0
  %664 = vmatprep.mubr.f32.mxu0 0.0
  %v665 = vand.u32 %v73, 4294901760
  %v666 = vsub.f32 %v73, %v665
  %v667 = vand.u32 %v666, 4294901760
  %668 = vmatmul.mubr.f32.gmra.mrb[0].mxu0 %v667
  %v669 = vpop.f32.mrb[0].mxu0
  %v670 = vadd.f32 %v542, %v669
  %v671 = vpop.f32.mrb[0].mxu0
  %672 = vmatprep.mubr.f32.mxu0 0.0
  %v673 = vand.u32 %v74, 4294901760
  %v674 = vsub.f32 %v74, %v673
  %v675 = vand.u32 %v674, 4294901760
  %676 = vmatmul.mubr.f32.gmra.mrb[0].mxu0 %v675
  %v677 = vpop.f32.mrb[0].mxu0
  %v678 = vadd.f32 %v549, %v677
  %v679 = vpop.f32.mrb[0].mxu0
  %680 = vdwg.mxu0
  %681 = vmatprep.subr.mxu0 0.0
  %v682 = vand.u32 %v75, 4294901760
  %v683 = vsub.f32 %v75, %v682
  %v684 = vand.u32 %v683, 4294901760
  %685 = vmatpush1.msra.mxu0 %v684
  %686 = vmatprep.subr.mxu0 0.0
  %v687 = vand.u32 %v76, 4294901760
  %v688 = vsub.f32 %v76, %v687
  %v689 = vand.u32 %v688, 4294901760
  %690 = vmatpush1.msra.mxu0 %v689
  %691 = vmatprep.subr.mxu0 0.0
  %v692 = vand.u32 %v77, 4294901760
  %v693 = vsub.f32 %v77, %v692
  %v694 = vand.u32 %v693, 4294901760
  %695 = vmatpush1.msra.mxu0 %v694
  %696 = vmatprep.subr.mxu0 0.0
  %v697 = vand.u32 %v78, 4294901760
  %v698 = vsub.f32 %v78, %v697
  %v699 = vand.u32 %v698, 4294901760
  %700 = vmatpush1.msra.mxu0 %v699
  %701 = vmatprep.subr.mxu0 0.0
  %v702 = vand.u32 %v79, 4294901760
  %v703 = vsub.f32 %v79, %v702
  %v704 = vand.u32 %v703, 4294901760
  %705 = vmatpush1.msra.mxu0 %v704
  %706 = vmatprep.subr.mxu0 0.0
  %v707 = vand.u32 %v80, 4294901760
  %v708 = vsub.f32 %v80, %v707
  %v709 = vand.u32 %v708, 4294901760
  %710 = vmatpush1.msra.mxu0 %v709
  %711 = vmatprep.subr.mxu0 0.0
  %v712 = vand.u32 %v81, 4294901760
  %v713 = vsub.f32 %v81, %v712
  %v714 = vand.u32 %v713, 4294901760
  %715 = vmatpush1.msra.mxu0 %v714
  %716 = vmatprep.subr.mxu0 0.0
  %v717 = vand.u32 %v82, 4294901760
  %v718 = vsub.f32 %v82, %v717
  %v719 = vand.u32 %v718, 4294901760
  %720 = vmatpush1.msra.mxu0 %v719
  %721 = vmatprep.subr.mxu0 0.0
  %v722 = vand.u32 %v83, 4294901760
  %v723 = vsub.f32 %v83, %v722
  %v724 = vand.u32 %v723, 4294901760
  %725 = vmatpush1.msra.mxu0 %v724
  %726 = vmatprep.subr.mxu0 0.0
  %v727 = vand.u32 %v84, 4294901760
  %v728 = vsub.f32 %v84, %v727
  %v729 = vand.u32 %v728, 4294901760
  %730 = vmatpush1.msra.mxu0 %v729
  %731 = vmatprep.subr.mxu0 0.0
  %v732 = vand.u32 %v85, 4294901760
  %v733 = vsub.f32 %v85, %v732
  %v734 = vand.u32 %v733, 4294901760
  %735 = vmatpush1.msra.mxu0 %v734
  %736 = vmatprep.subr.mxu0 0.0
  %v737 = vand.u32 %v86, 4294901760
  %v738 = vsub.f32 %v86, %v737
  %v739 = vand.u32 %v738, 4294901760
  %740 = vmatpush1.msra.mxu0 %v739
  %741 = vmatprep.subr.mxu0 0.0
  %v742 = vand.u32 %v87, 4294901760
  %v743 = vsub.f32 %v87, %v742
  %v744 = vand.u32 %v743, 4294901760
  %745 = vmatpush1.msra.mxu0 %v744
  %746 = vmatprep.subr.mxu0 0.0
  %v747 = vand.u32 %v88, 4294901760
  %v748 = vsub.f32 %v88, %v747
  %v749 = vand.u32 %v748, 4294901760
  %750 = vmatpush1.msra.mxu0 %v749
  %751 = vmatprep.subr.mxu0 0.0
  %v752 = vand.u32 %v89, 4294901760
  %v753 = vsub.f32 %v89, %v752
  %v754 = vand.u32 %v753, 4294901760
  %755 = vmatpush1.msra.mxu0 %v754
  %756 = vmatprep.subr.mxu0 0.0
  %v757 = vand.u32 %v90, 4294901760
  %v758 = vsub.f32 %v90, %v757
  %v759 = vand.u32 %v758, 4294901760
  %760 = vmatpush1.msra.mxu0 %v759
  %761 = vmatprep.subr.mxu0 0.0
  %762 = vmatpush1.msra.mxu0 0.0
  %763 = vmatprep.subr.mxu0 0.0
  %764 = vmatpush1.msra.mxu0 0.0
  %765 = vmatprep.subr.mxu0 0.0
  %766 = vmatpush1.msra.mxu0 0.0
  %767 = vmatprep.subr.mxu0 0.0
  %768 = vmatpush1.msra.mxu0 0.0
  %769 = vmatprep.subr.mxu0 0.0
  %770 = vmatpush1.msra.mxu0 0.0
  %771 = vmatprep.subr.mxu0 0.0
  %772 = vmatpush1.msra.mxu0 0.0
  %773 = vmatprep.subr.mxu0 0.0
  %774 = vmatpush1.msra.mxu0 0.0
  %775 = vmatprep.subr.mxu0 0.0
  %776 = vmatpush1.msra.mxu0 0.0
  %777 = vmatprep.subr.mxu0 0.0
  %778 = vmatpush1.msra.mxu0 0.0
  %779 = vmatprep.subr.mxu0 0.0
  %780 = vmatpush1.msra.mxu0 0.0
  %781 = vmatprep.subr.mxu0 0.0
  %782 = vmatpush1.msra.mxu0 0.0
  %783 = vmatprep.subr.mxu0 0.0
  %784 = vmatpush1.msra.mxu0 0.0
  %785 = vmatprep.subr.mxu0 0.0
  %786 = vmatpush1.msra.mxu0 0.0
  %787 = vmatprep.subr.mxu0 0.0
  %788 = vmatpush1.msra.mxu0 0.0
  %789 = vmatprep.subr.mxu0 0.0
  %790 = vmatpush1.msra.mxu0 0.0
  %791 = vmatprep.subr.mxu0 0.0
  %792 = vmatpush1.msra.mxu0 0.0
  %793 = vmatprep.mubr.f32.mxu0 0.0
  %v794 = vand.u32 %v69, 4294901760
  %795 = vmatmul.mubr.f32.gmra.mrb[0].mxu0 %v794
  %v796 = vpop.f32.mrb[0].mxu0
  %v797 = vadd.f32 %v638, %v796
  %v798 = vpop.f32.mrb[0].mxu0
  %799 = vmatprep.mubr.f32.mxu0 0.0
  %v800 = vand.u32 %v70, 4294901760
  %801 = vmatmul.mubr.f32.gmra.mrb[0].mxu0 %v800
  %v802 = vpop.f32.mrb[0].mxu0
  %v803 = vadd.f32 %v646, %v802
  %v804 = vpop.f32.mrb[0].mxu0
  %805 = vmatprep.mubr.f32.mxu0 0.0
  %v806 = vand.u32 %v71, 4294901760
  %807 = vmatmul.mubr.f32.gmra.mrb[0].mxu0 %v806
  %v808 = vpop.f32.mrb[0].mxu0
  %v809 = vadd.f32 %v654, %v808
  %v810 = vpop.f32.mrb[0].mxu0
  %811 = vmatprep.mubr.f32.mxu0 0.0
  %v812 = vand.u32 %v72, 4294901760
  %813 = vmatmul.mubr.f32.gmra.mrb[0].mxu0 %v812
  %v814 = vpop.f32.mrb[0].mxu0
  %v815 = vadd.f32 %v662, %v814
  %v816 = vpop.f32.mrb[0].mxu0
  %817 = vmatprep.mubr.f32.mxu0 0.0
  %v818 = vand.u32 %v73, 4294901760
  %819 = vmatmul.mubr.f32.gmra.mrb[0].mxu0 %v818
  %v820 = vpop.f32.mrb[0].mxu0
  %v821 = vadd.f32 %v670, %v820
  %v822 = vpop.f32.mrb[0].mxu0
  %823 = vmatprep.mubr.f32.mxu0 0.0
  %v824 = vand.u32 %v74, 4294901760
  %825 = vmatmul.mubr.f32.gmra.mrb[0].mxu0 %v824
  %v826 = vpop.f32.mrb[0].mxu0
  %v827 = vadd.f32 %v678, %v826
  %v828 = vpop.f32.mrb[0].mxu0
  %829 = vdwg.mxu0
  %830 = vmatprep.subr.mxu0 0.0
  %v831 = vand.u32 %v75, 4294901760
  %832 = vmatpush1.msra.mxu0 %v831
  %833 = vmatprep.subr.mxu0 0.0
  %v834 = vand.u32 %v76, 4294901760
  %835 = vmatpush1.msra.mxu0 %v834
  %836 = vmatprep.subr.mxu0 0.0
  %v837 = vand.u32 %v77, 4294901760
  %838 = vmatpush1.msra.mxu0 %v837
  %839 = vmatprep.subr.mxu0 0.0
  %v840 = vand.u32 %v78, 4294901760
  %841 = vmatpush1.msra.mxu0 %v840
  %842 = vmatprep.subr.mxu0 0.0
  %v843 = vand.u32 %v79, 4294901760
  %844 = vmatpush1.msra.mxu0 %v843
  %845 = vmatprep.subr.mxu0 0.0
  %v846 = vand.u32 %v80, 4294901760
  %847 = vmatpush1.msra.mxu0 %v846
  %848 = vmatprep.subr.mxu0 0.0
  %v849 = vand.u32 %v81, 4294901760
  %850 = vmatpush1.msra.mxu0 %v849
  %851 = vmatprep.subr.mxu0 0.0
  %v852 = vand.u32 %v82, 4294901760
  %853 = vmatpush1.msra.mxu0 %v852
  %854 = vmatprep.subr.mxu0 0.0
  %v855 = vand.u32 %v83, 4294901760
  %856 = vmatpush1.msra.mxu0 %v855
  %857 = vmatprep.subr.mxu0 0.0
  %v858 = vand.u32 %v84, 4294901760
  %859 = vmatpush1.msra.mxu0 %v858
  %860 = vmatprep.subr.mxu0 0.0
  %v861 = vand.u32 %v85, 4294901760
  %862 = vmatpush1.msra.mxu0 %v861
  %863 = vmatprep.subr.mxu0 0.0
  %v864 = vand.u32 %v86, 4294901760
  %865 = vmatpush1.msra.mxu0 %v864
  %866 = vmatprep.subr.mxu0 0.0
  %v867 = vand.u32 %v87, 4294901760
  %868 = vmatpush1.msra.mxu0 %v867
  %869 = vmatprep.subr.mxu0 0.0
  %v870 = vand.u32 %v88, 4294901760
  %871 = vmatpush1.msra.mxu0 %v870
  %872 = vmatprep.subr.mxu0 0.0
  %v873 = vand.u32 %v89, 4294901760
  %874 = vmatpush1.msra.mxu0 %v873
  %875 = vmatprep.subr.mxu0 0.0
  %v876 = vand.u32 %v90, 4294901760
  %877 = vmatpush1.msra.mxu0 %v876
  %878 = vmatprep.subr.mxu0 0.0
  %879 = vmatpush1.msra.mxu0 0.0
  %880 = vmatprep.subr.mxu0 0.0
  %881 = vmatpush1.msra.mxu0 0.0
  %882 = vmatprep.subr.mxu0 0.0
  %883 = vmatpush1.msra.mxu0 0.0
  %884 = vmatprep.subr.mxu0 0.0
  %885 = vmatpush1.msra.mxu0 0.0
  %886 = vmatprep.subr.mxu0 0.0
  %887 = vmatpush1.msra.mxu0 0.0
  %888 = vmatprep.subr.mxu0 0.0
  %889 = vmatpush1.msra.mxu0 0.0
  %890 = vmatprep.subr.mxu0 0.0
  %891 = vmatpush1.msra.mxu0 0.0
  %892 = vmatprep.subr.mxu0 0.0
  %893 = vmatpush1.msra.mxu0 0.0
  %894 = vmatprep.subr.mxu0 0.0
  %895 = vmatpush1.msra.mxu0 0.0
  %896 = vmatprep.subr.mxu0 0.0
  %897 = vmatpush1.msra.mxu0 0.0
  %898 = vmatprep.subr.mxu0 0.0
  %899 = vmatpush1.msra.mxu0 0.0
  %900 = vmatprep.subr.mxu0 0.0
  %901 = vmatpush1.msra.mxu0 0.0
  %902 = vmatprep.subr.mxu0 0.0
  %903 = vmatpush1.msra.mxu0 0.0
  %904 = vmatprep.subr.mxu0 0.0
  %905 = vmatpush1.msra.mxu0 0.0
  %906 = vmatprep.subr.mxu0 0.0
  %907 = vmatpush1.msra.mxu0 0.0
  %908 = vmatprep.subr.mxu0 0.0
  %909 = vmatpush1.msra.mxu0 0.0
  %910 = vmatprep.mubr.f32.mxu0 0.0
  %v911 = vand.u32 %v69, 4294901760
  %912 = vmatmul.mubr.f32.gmra.mrb[0].mxu0 %v911
  %v913 = vpop.f32.mrb[0].mxu0
  %v914 = vadd.f32 %v797, %v913
  %v915 = vpop.f32.mrb[0].mxu0
  %916 = vmatprep.mubr.f32.mxu0 0.0
  %v917 = vand.u32 %v70, 4294901760
  %918 = vmatmul.mubr.f32.gmra.mrb[0].mxu0 %v917
  %v919 = vpop.f32.mrb[0].mxu0
  %v920 = vadd.f32 %v803, %v919
  %v921 = vpop.f32.mrb[0].mxu0
  %922 = vmatprep.mubr.f32.mxu0 0.0
  %v923 = vand.u32 %v71, 4294901760
  %924 = vmatmul.mubr.f32.gmra.mrb[0].mxu0 %v923
  %v925 = vpop.f32.mrb[0].mxu0
  %v926 = vadd.f32 %v809, %v925
  %v927 = vpop.f32.mrb[0].mxu0
  %928 = vmatprep.mubr.f32.mxu0 0.0
  %v929 = vand.u32 %v72, 4294901760
  %930 = vmatmul.mubr.f32.gmra.mrb[0].mxu0 %v929
  %v931 = vpop.f32.mrb[0].mxu0
  %v932 = vadd.f32 %v815, %v931
  %v933 = vpop.f32.mrb[0].mxu0
  %934 = vmatprep.mubr.f32.mxu0 0.0
  %v935 = vand.u32 %v73, 4294901760
  %936 = vmatmul.mubr.f32.gmra.mrb[0].mxu0 %v935
  %v937 = vpop.f32.mrb[0].mxu0
  %v938 = vadd.f32 %v821, %v937
  %v939 = vpop.f32.mrb[0].mxu0
  %940 = vmatprep.mubr.f32.mxu0 0.0
  %v941 = vand.u32 %v74, 4294901760
  %942 = vmatmul.mubr.f32.gmra.mrb[0].mxu0 %v941
  %v943 = vpop.f32.mrb[0].mxu0
  %v944 = vadd.f32 %v827, %v943
  %v945 = vpop.f32.mrb[0].mxu0
  %946 = vdwg.mxu0
  %v947 = vadd.f32 %v69, %v914
  %v948 = vadd.f32 %v70, %v920
  %v949 = vadd.f32 %v71, %v926
  %v950 = vadd.f32 %v72, %v932
  %v951 = vadd.f32 %v73, %v938
  %v952 = vadd.f32 %v74, %v944
  %v953 = vld [vmem:[%s4] sm:$0x1]
  %v955 = vlaneseq
  %v956 = vshrl.u32 %v955, 7
  %v957 = vsub.s32 0, %v956
  %v958 = vrot.slane %v953, %v957
  %v960 = vadd.f32 %v947, %v958
  %v961 = vadd.f32 %v948, %v958
  %v962 = vadd.f32 %v949, %v958
  %v963 = vadd.f32 %v950, %v958
  %v964 = vadd.f32 %v951, %v958
  %v965 = vadd.f32 %v952, %v958
  %966 = vst [vmem:[%s6] sm:$0xff] %v960
  %967 = vst [vmem:[%s6 + $0x8] sm:$0xff] %v961
  %968 = vst [vmem:[%s6 + $0x10] sm:$0xff] %v962
  %969 = vst [vmem:[%s6 + $0x18] sm:$0xff] %v963
  %970 = vst [vmem:[%s6 + $0x20] sm:$0xff] %v964
  %971 = vst [vmem:[%s6 + $0x28] sm:$0xff] %v965
  // Predicated region
  $region22: #{prompt_learner_forward.1} parent=0 // pred_check
    _
  $region23: #{prompt_learner_forward.1} parent=0 // pred_check_branch
    %973 = sbr.rel (0) target = $region25
  $region24: #{prompt_learner_forward.1} parent=0 // pred_region
    _
  $region25: #{prompt_learner_forward.1} parent=0 // pred_fallthru
    _
  // Predicated region
  $region26: #{prompt_learner_forward.1} parent=0 // pred_check
    _
  $region27: #{prompt_learner_forward.1} parent=0 // pred_check_branch
    %975 = sbr.rel (0) target = $region29
  $region28: #{prompt_learner_forward.1} parent=0 // pred_region
    _
  $region29: #{prompt_learner_forward.1} parent=0 // pred_fallthru
    _
  // Predicated region
  $region30: #{prompt_learner_forward.1} parent=0 // pred_check
    _
  $region31: #{prompt_learner_forward.1} parent=0 // pred_check_branch
    %977 = sbr.rel (0) target = $region33
  $region32: #{prompt_learner_forward.1} parent=0 // pred_region
    _
  $region33: #{prompt_learner_forward.1} parent=0 // pred_fallthru
    _
  // Predicated region
  $region34: #{prompt_learner_forward.1} parent=0 // pred_check
    _
  $region35: #{prompt_learner_forward.1} parent=0 // pred_check_branch
    %979 = sbr.rel (0) target = $region37
  $region36: #{prompt_learner_forward.1} parent=0 // pred_region
    _
  $region37: #{prompt_learner_forward.1} parent=0 // pred_fallthru
    _

</llo_original>
